<compile_context>
chip_gen: v6e
topology: v6e:2x2x1
jax: 0.10.0
libtpu: 0.0.40
codegen_flags: <defaults>
</compile_context>

<pallas_src>
import functools
import math

import jax
import jax.numpy as jnp
from jax import lax
from jax.experimental import pallas as pl
from jax.experimental.pallas import tpu as pltpu

# MXU operand / activation dtype (accumulation is always f32).
COMPUTE_DTYPE = jnp.bfloat16


# ----------------------------------------------------------------------------
# Pallas kernels: grouped matmul + bias (+ optional fused ReLU)
# ----------------------------------------------------------------------------
def _gmm_kernel_single(a_ref, b_ref, bias_ref, o_ref, *, relu):
    # Single K step: no accumulator needed.
    res = jnp.dot(a_ref[0], b_ref[0], preferred_element_type=jnp.float32)
    res = res + bias_ref[0]
    if relu:
        res = jnp.maximum(res, 0.0)
    o_ref[...] = res[None].astype(o_ref.dtype)


def _gmm_kernel_multi_inplace(a_ref, b_ref, bias_ref, o_ref, *, relu):
    # f32 output: accumulate directly into the resident output block.
    k = pl.program_id(3)

    @pl.when(k == 0)
    def _():
        o_ref[...] = jnp.zeros_like(o_ref)

    o_ref[...] += jnp.dot(a_ref[0], b_ref[0],
                          preferred_element_type=jnp.float32)[None]

    @pl.when(k == pl.num_programs(3) - 1)
    def _():
        res = o_ref[...] + bias_ref[...]
        if relu:
            res = jnp.maximum(res, 0.0)
        o_ref[...] = res


def _gmm_kernel_multi_acc(a_ref, b_ref, bias_ref, o_ref, acc_ref, *, relu):
    # bf16 output: keep a f32 VMEM accumulator, cast in the epilogue.
    k = pl.program_id(3)

    @pl.when(k == 0)
    def _():
        acc_ref[...] = jnp.zeros_like(acc_ref)

    acc_ref[...] += jnp.dot(a_ref[0], b_ref[0],
                            preferred_element_type=jnp.float32)

    @pl.when(k == pl.num_programs(3) - 1)
    def _():
        res = acc_ref[...] + bias_ref[0]
        if relu:
            res = jnp.maximum(res, 0.0)
        o_ref[...] = res[None].astype(o_ref.dtype)


# ----------------------------------------------------------------------------
# Tiling helpers (all Python-int, trace-time)
# ----------------------------------------------------------------------------
def _round_up(x, m):
    return ((x + m - 1) // m) * m


def _choose_tile(d, full_max=512):
    """Full-dim block when small; otherwise an exact divisor (no padding)."""
    if d <= full_max:
        return d
    for t in (512, 256, 128, 64, 32, 16, 8):
        if d % t == 0:
            return t
    return d


def _choose_k(Ka, tk_max=2304):
    """Ka is a multiple of 128.  Returns (num_k_steps, TK) with TK % 128 == 0
    and minimal (bounded) padding overshoot.  TK is capped at 2304 so the
    double-buffered tile set fits the scoped VMEM on every generation."""
    if Ka <= tk_max:
        return 1, Ka
    units = Ka // 128
    max_units = tk_max // 128
    nk0 = -(-units // max_units)
    best = None
    for nk in range(nk0, nk0 + 4):
        tku = -(-units // nk)
        waste = nk * tku - units
        if best is None or waste < best[2]:
            best = (nk, tku * 128, waste)
        if waste == 0:
            break
    return best[0], best[1]


# ----------------------------------------------------------------------------
# Grouped matmul dispatch
# ----------------------------------------------------------------------------
def _pallas_gmm(a, w, bias, relu, out_dtype):
    """a: (G,M,K) bf16, w: (G,K,N) bf16, bias: (G,N) f32 -> (G,M,N) out_dtype.
    Preconditions (ensured by the caller / weight prep):
    M % 8 == 0, N % 128 == 0, K % 128 == 0."""
    G, M, K = a.shape
    N = w.shape[2]
    TM = _choose_tile(M)
    TN = _choose_tile(N)
    nk, TK = _choose_k(K)
    Kp = nk * TK
    if Kp != K:  # safety net only; weights are pre-padded so this is rare
        a = jnp.pad(a, ((0, 0), (0, 0), (0, Kp - K)))
        w = jnp.pad(w, ((0, 0), (0, Kp - K), (0, 0)))

    # v7x has 2 TensorCores: make sure the parallel axes offer >= 2 blocks.
    if G * (M // TM) * (N // TN) < 2:
        if M // TM == 1 and TM % 16 == 0:
            TM //= 2
        elif N // TN == 1 and TN % 256 == 0:
            TN //= 2

    out_is_f32 = jnp.dtype(out_dtype) == jnp.dtype(jnp.float32)
    if nk == 1:
        kernel = functools.partial(_gmm_kernel_single, relu=relu)
        scratch = []
    elif out_is_f32:
        kernel = functools.partial(_gmm_kernel_multi_inplace, relu=relu)
        scratch = []
    else:
        kernel = functools.partial(_gmm_kernel_multi_acc, relu=relu)
        scratch = [pltpu.VMEM((TM, TN), jnp.float32)]

    out_isz = jnp.dtype(out_dtype).itemsize
    # Explicit scoped-VMEM budget: double-buffered bf16 A/B tiles, output
    # tiles, f32 accumulator, bias, with ~2x headroom for Mosaic internals.
    tile_bytes = (2 * 2 * (TM * TK + TK * TN) + 2 * TM * TN * out_isz
                  + TM * TN * 4 + 2 * 4 * TN)
    vmem_limit = int(min(2 * tile_bytes + (8 << 20), 64 << 20))

    cost = pl.CostEstimate(
        flops=2 * G * M * N * Kp,
        transcendentals=0,
        bytes_accessed=int(a.size * 2 + w.size * 2 + bias.size * 4
                           + G * M * N * out_isz))

    bias2 = bias.reshape(G, 1, N)
    return pl.pallas_call(
        kernel,
        out_shape=jax.ShapeDtypeStruct((G, M, N), out_dtype),
        grid_spec=pltpu.PrefetchScalarGridSpec(
            num_scalar_prefetch=0,
            grid=(G, M // TM, N // TN, nk),
            in_specs=[
                pl.BlockSpec((1, TM, TK), lambda g, i, j, k: (g, i, k)),
                pl.BlockSpec((1, TK, TN), lambda g, i, j, k: (g, k, j)),
                pl.BlockSpec((1, 1, TN), lambda g, i, j, k: (g, 0, j)),
            ],
            out_specs=pl.BlockSpec((1, TM, TN), lambda g, i, j, k: (g, i, j)),
            scratch_shapes=scratch,
        ),
        compiler_params=pltpu.CompilerParams(
            dimension_semantics=("parallel", "parallel", "parallel",
                                 "arbitrary"),
            vmem_limit_bytes=vmem_limit),
        cost_estimate=cost,
    )(a, w, bias2)


def grouped_matmul(a, wp, relu=False, out_dtype=jnp.float32):
    """a: (G,M,K) activations, wp: prepared weight dict -> (G,M,N) out_dtype.

    wp['w']: (G, Kp, Np) bf16 (K,N pre-padded), wp['b']: (G, Np) f32,
    wp['k']/wp['n']: valid K / N.
    """
    G, M, K = a.shape
    w, bias = wp['w'], wp['b']
    Kp, Np = w.shape[1], w.shape[2]
    N = wp['n']

    # Degenerate shapes are pure weight streaming: keep them in XLA.
    if M < 16 or N < 32:
        a_c = a.astype(COMPUTE_DTYPE)
        if Kp != K:
            a_c = jnp.pad(a_c, ((0, 0), (0, 0), (0, Kp - K)))
        out = jnp.einsum("gmk,gkn->gmn", a_c, w,
                         preferred_element_type=jnp.float32)
        out = out + bias[:, None, :]
        if relu:
            out = jnp.maximum(out, 0.0)
        if Np != N:
            out = out[:, :, :N]
        return out.astype(out_dtype)

    a_c = a.astype(COMPUTE_DTYPE)
    Mp = _round_up(M, 8)  # avoid sublane-ragged full-dim tiles (e.g. 98 -> 104)
    if Mp != M or Kp != K:
        a_c = jnp.pad(a_c, ((0, 0), (0, Mp - M), (0, Kp - K)))
    out = _pallas_gmm(a_c, w, bias, relu, out_dtype)
    if Mp != M or Np != N:
        out = out[:, :M, :N]
    return out


# ----------------------------------------------------------------------------
# Weight preparation: done ONCE at parameter-build time (bf16, (G,K,N) layout,
# K padded to the kernel's K tiling, N padded to a multiple of 128).
# ----------------------------------------------------------------------------
def _prep_weight(wm, bias):
    """wm: (G,K,N), bias: (G,N) -> prepared dict."""
    G, K, N = wm.shape
    Ka = _round_up(K, 128)
    nk, TK = _choose_k(Ka)
    Kp = nk * TK
    Np = _round_up(N, 128) if N >= 32 else N
    wm = wm.astype(COMPUTE_DTYPE)
    bias = bias.astype(jnp.float32)
    if Kp != K or Np != N:
        wm = jnp.pad(wm, ((0, 0), (0, Kp - K), (0, Np - N)))
        bias = jnp.pad(bias, ((0, 0), (0, Np - N)))
    return {'w': wm, 'b': bias, 'k': K, 'n': N}


def prep_conv2d(w, b, groups):
    """w: (Cout, Cin/groups, kh, kw) PyTorch layout -> matmul layout."""
    Cout, Cg, kh, kw = w.shape
    G = groups
    Cog = Cout // G
    w = w.astype(COMPUTE_DTYPE)
    # K index = cg*(kh*kw) + (dy*kw + dx), matching the im2col built below.
    wm = w.reshape(G, Cog, Cg * kh * kw).transpose(0, 2, 1)
    return _prep_weight(wm, b.reshape(G, Cog))


def prep_conv1d(w, b, groups):
    return prep_conv2d(w[..., None], b, groups)


def prep_deconv(w, b, groups, k):
    """w: (Cin, Cout/groups, k, k) PyTorch ConvTranspose2d layout."""
    Cin, Cog = w.shape[0], w.shape[1]
    G = groups
    Cg = Cin // G
    w = w.astype(COMPUTE_DTYPE)
    wm = w.reshape(G, Cg, Cog * k * k)          # N index = (cog*k + ky)*k + kx
    bias = jnp.repeat(b.reshape(G, Cog), k * k, axis=1)
    return _prep_weight(wm, bias)


def prep_linear(w, b):
    return {'w': w.astype(COMPUTE_DTYPE), 'b': b.astype(jnp.float32)}


# ----------------------------------------------------------------------------
# NN layers on top of the kernel.  Canonical activation layout: (G,B,H,W,Cg),
# activations kept in bf16 between layers.
# ----------------------------------------------------------------------------
def conv2d_3x3(x, wp, relu=False, out_dtype=COMPUTE_DTYPE):
    """3x3 conv, padding=1, stride=1 (PyTorch cross-correlation semantics)."""
    G, B, H, W, Cg = x.shape
    x = x.astype(COMPUTE_DTYPE)
    xp = jnp.pad(x, ((0, 0), (0, 0), (1, 1), (1, 1), (0, 0)))
    # TODO(synk): im2col materialized in bf16 by XLA (see header note).
    taps = [xp[:, :, dy:dy + H, dx:dx + W, :]
            for dy in range(3) for dx in range(3)]
    p = jnp.stack(taps, axis=-1)                       # (G,B,H,W,Cg,9)
    a = p.reshape(G, B * H * W, Cg * 9)                # K index = cg*9 + tap
    out = grouped_matmul(a, wp, relu=relu, out_dtype=out_dtype)
    return out.reshape(G, B, H, W, wp['n'])


def conv2d_1x1(x, wp, relu=False, out_dtype=COMPUTE_DTYPE):
    G, B, H, W, Cg = x.shape
    a = x.astype(COMPUTE_DTYPE).reshape(G, B * H * W, Cg)
    out = grouped_matmul(a, wp, relu=relu, out_dtype=out_dtype)
    return out.reshape(G, B, H, W, wp['n'])


def conv1d_1x1(x, wp, relu=False, out_dtype=jnp.float32):
    """x: (G, B, Cin_pg) 'length-1 sequence' grouped Conv1d (tiny M -> XLA)."""
    return grouped_matmul(x.astype(COMPUTE_DTYPE), wp, relu=relu,
                          out_dtype=out_dtype)          # (G,B,Cog)


def linear(x, wp, relu=False):
    """x: (B, In).  B=2 -> weight streaming, keep in XLA dot."""
    out = lax.dot_general(x.astype(COMPUTE_DTYPE), wp['w'],
                          (((1,), (1,)), ((), ())),
                          preferred_element_type=jnp.float32)
    out = out + wp['b']
    return jnp.maximum(out, 0.0) if relu else out


def conv_transpose(x, wp, k, stride, out_dtype=COMPUTE_DTYPE):
    """ConvTranspose2d for the non-overlapping cases used here."""
    G, B, H, W, Cg = x.shape
    assert stride == k or (H == 1 and W == 1), (
        "only non-overlapping ConvTranspose2d (stride == kernel or 1x1 input)")
    Cog = wp['n'] // (k * k)
    a = x.reshape(G, B * H * W, Cg)
    out = grouped_matmul(a, wp, relu=False, out_dtype=out_dtype)
    out = out.reshape(G, B, H, W, Cog, k, k)
    out = out.transpose(0, 1, 2, 5, 3, 6, 4)           # (G,B,H,k,W,k,Cog)
    return out.reshape(G, B, H * k, W * k, Cog)


def batchnorm(x, eps=1e-5):
    # train-mode batch statistics, gamma=1, beta=0 (default BN init)
    x32 = x.astype(jnp.float32)
    mean = x32.mean(axis=(1, 2, 3), keepdims=True)
    var = ((x32 - mean) ** 2).mean(axis=(1, 2, 3), keepdims=True)
    return ((x32 - mean) * lax.rsqrt(var + eps)).astype(x.dtype)


def maxpool2(x):
    G, B, H, W, C = x.shape
    H2, W2 = H // 2, W // 2
    x = x[:, :, :H2 * 2, :W2 * 2, :]
    return x.reshape(G, B, H2, 2, W2, 2, C).max(axis=(3, 5))


def regroup(x, g_new):
    """(G,B,H,W,Cg) -> (g_new,B,H,W,C//g_new), preserving NCHW channel order."""
    G, B, H, W, Cg = x.shape
    C = G * Cg
    x = x.transpose(1, 2, 3, 0, 4).reshape(B, H, W, C)
    return x.reshape(B, H, W, g_new, C // g_new).transpose(3, 0, 1, 2, 4)


def adaptive_avg_pool_flat(x, out=7):
    """x: (B,H,W,C) -> (B, C*out*out) flattened in PyTorch NCHW order."""
    x = x.astype(jnp.float32)
    B, H, W, C = x.shape
    rows = []
    for i in range(out):
        h0, h1 = (i * H) // out, -(-((i + 1) * H) // out)
        cols = []
        for j in range(out):
            w0, w1 = (j * W) // out, -(-((j + 1) * W) // out)
            cols.append(x[:, h0:h1, w0:w1, :].mean(axis=(1, 2)))  # (B,C)
        rows.append(jnp.stack(cols, axis=1))                      # (B,out,C)
    pooled = jnp.stack(rows, axis=1)                              # (B,out,out,C)
    return pooled.transpose(0, 3, 1, 2).reshape(B, -1)


def affine_grid(theta, H, W):
    # F.affine_grid, align_corners=False
    xs = (jnp.arange(W, dtype=jnp.float32) + 0.5) * (2.0 / W) - 1.0
    ys = (jnp.arange(H, dtype=jnp.float32) + 0.5) * (2.0 / H) - 1.0
    xg, yg = jnp.meshgrid(xs, ys, indexing="xy")
    base = jnp.stack([xg, yg, jnp.ones_like(xg)], axis=-1)        # (H,W,3)
    return jnp.einsum("nij,hwj->nhwi", theta, base)               # (N,H,W,2)


def grid_sample_nhwc(img, grid):
    # F.grid_sample, mode='bilinear', padding_mode='border', align_corners=False
    N, Hin, Win, C = img.shape
    gx, gy = grid[..., 0], grid[..., 1]
    ix = jnp.clip(((gx + 1.0) * Win - 1.0) / 2.0, 0.0, Win - 1.0)
    iy = jnp.clip(((gy + 1.0) * Hin - 1.0) / 2.0, 0.0, Hin - 1.0)
    x0, y0 = jnp.floor(ix), jnp.floor(iy)
    wx1, wy1 = ix - x0, iy - y0
    x0i = jnp.clip(x0, 0, Win - 1).astype(jnp.int32)
    x1i = jnp.clip(x0 + 1.0, 0, Win - 1).astype(jnp.int32)
    y0i = jnp.clip(y0, 0, Hin - 1).astype(jnp.int32)
    y1i = jnp.clip(y0 + 1.0, 0, Hin - 1).astype(jnp.int32)

    def per_n(im, y0i, x0i, y1i, x1i, wy1, wx1):
        wx0, wy0 = 1.0 - wx1, 1.0 - wy1
        v00 = im[y0i, x0i]
        v01 = im[y0i, x1i]
        v10 = im[y1i, x0i]
        v11 = im[y1i, x1i]
        return (v00 * (wy0 * wx0)[..., None] + v01 * (wy0 * wx1)[..., None] +
                v10 * (wy1 * wx0)[..., None] + v11 * (wy1 * wx1)[..., None])

    return jax.vmap(per_n)(img, y0i, x0i, y1i, x1i, wy1, wx1)


# ----------------------------------------------------------------------------
# Deterministic parameter construction (prepared weights built once)
# ----------------------------------------------------------------------------
class ParamGen:
    def __init__(self, seed=0):
        self._key = jax.random.PRNGKey(seed)

    def _next(self):
        self._key, k = jax.random.split(self._key)
        return k

    def _uniform(self, shape, fan_in, fan_out):
        a = math.sqrt(6.0 / (fan_in + fan_out))
        return jax.random.uniform(self._next(), shape, jnp.float32, -a, a)

    def conv2d(self, cin, cout, k, groups=1):
        w = self._uniform((cout, cin // groups, k, k),
                          (cin // groups) * k * k, (cout // groups) * k * k)
        return w, jnp.zeros((cout,), jnp.float32)

    def conv_transpose2d(self, cin, cout, k, groups=1):
        w = self._uniform((cin, cout // groups, k, k),
                          (cin // groups) * k * k, (cout // groups) * k * k)
        return w, jnp.zeros((cout,), jnp.float32)

    def conv1d(self, cin, cout, groups=1):
        w = self._uniform((cout, cin // groups, 1), cin // groups,
                          cout // groups)
        return w, jnp.zeros((cout,), jnp.float32)

    def linear(self, fin, fout):
        w = self._uniform((fout, fin), fin, fout)
        return w, jnp.zeros((fout,), jnp.float32)


VGG_CFG = [64, 64, 'M', 128, 128, 'M', 256, 256, 256, 256, 'M',
           512, 512, 512, 512, 'M', 512, 512, 512, 512, 'M']


def basic_block_params(pg, cin, cout, nlayers, groups):
    mid = (cin + cout) // 2
    chans = [cin] + [mid] * (nlayers - 1) + [cout]
    return [prep_conv2d(*pg.conv2d(chans[i], chans[i + 1], 3, groups), groups)
            for i in range(nlayers)]


def localization_params(pg, cin, groups, input_size):
    h, w = input_size
    cout = cin // 4
    cpg = cout // groups
    l_in = (h // 4) * (w // 4) * cpg // 4 * groups
    l_out = l_in // 4
    return {
        'enc1': basic_block_params(pg, cin, cout, 2, groups),
        'enc2': basic_block_params(pg, cout, cout // 4, 2, groups),
        'fc1': prep_conv1d(*pg.conv1d(l_in, l_out, groups), groups),
        'fc2': prep_conv1d(*pg.conv1d(l_out, l_out, groups), groups),
        # last fc_loc layer: zero weight, identity affine bias (as in __init__)
        'fc3': prep_conv1d(
            jnp.zeros((6 * groups, l_out // groups, 1), jnp.float32),
            jnp.tile(jnp.array([1., 0., 0., 0., 1., 0.], jnp.float32), groups),
            groups),
    }


def spfp_params(pg, cin, cout, groups):
    return {'loc': localization_params(pg, cin, groups, (14, 14)),
            'block': basic_block_params(pg, cin + 2 * groups, cout, 3, groups)}


def build_params(seed=0):
    pg = ParamGen(seed)
    P = {}
    convs = []
    cin = 3
    for v in VGG_CFG:
        if v == 'M':
            continue
        convs.append(prep_conv2d(*pg.conv2d(cin, v, 3, 1), 1))
        cin = v
    P['vgg_convs'] = convs
    P['fc'] = [prep_linear(*pg.linear(512 * 7 * 7, 4096)),
               prep_linear(*pg.linear(4096, 4096)),
               prep_linear(*pg.linear(4096, 1024))]
    P['dec5'] = {'deconv': prep_deconv(*pg.conv_transpose2d(1024, 1024, 7, 1),
                                       1, 7),
                 'block': basic_block_params(pg, 1024, 6 * 256, 3, 1)}
    P['dec4'] = {'deconv': prep_deconv(*pg.conv_transpose2d(6 * 256, 6 * 256,
                                                            2, 6), 6, 2),
                 'block': basic_block_params(pg, 6 * 256, 6 * 256, 3, 6)}
    P['spfp3'] = spfp_params(pg, 6 * 256, 6 * 128, 6)
    P['spfp2'] = spfp_params(pg, 6 * 128, 6 * 64, 6)
    P['spfp1'] = spfp_params(pg, 6 * 64, 6 * 32, 6)
    P['fcn_dec'] = [prep_conv2d(*pg.conv2d(6 * 32, 96, 3, 6), 6),
                    prep_conv2d(*pg.conv2d(96, 6 * 3, 1, 6), 6)]
    return P


# ----------------------------------------------------------------------------
# Module forward passes
# ----------------------------------------------------------------------------
def basic_block_apply(params, x):
    for wp in params:
        x = conv2d_3x3(x, wp, relu=False, out_dtype=COMPUTE_DTYPE)
        x = jnp.maximum(batchnorm(x), 0.0)
    return x


def decoder_block_apply(p, x, k, stride):
    x = conv_transpose(x, p['deconv'], k, stride)
    return basic_block_apply(p['block'], x)


def localization_apply(p, x):
    G = x.shape[0]
    x = basic_block_apply(p['enc1'], x)
    x = maxpool2(x)
    x = basic_block_apply(p['enc2'], x)
    x = maxpool2(x)
    _, B, hh, ww, C = x.shape
    # PyTorch flattens NCHW: per group order is (c, y, x)
    x = x.transpose(0, 1, 4, 2, 3).reshape(G, B, C * hh * ww)
    x = conv1d_1x1(x, p['fc1'], relu=True)
    x = conv1d_1x1(x, p['fc2'], relu=True)
    x = conv1d_1x1(x, p['fc3'], relu=False)            # (G,B,6)
    theta = x.transpose(1, 0, 2).reshape(B * G, 2, 3)  # index = b*G + g
    return theta


def spfp_apply(p, x, x_pool):
    # x: (G,B,h,w,c); x_pool: (B,h_,w_,c_)
    G, B, h, w, c = x.shape
    _, h_, w_, c_ = x_pool.shape
    assert c == c_
    theta = localization_apply(p['loc'], x)
    grid = affine_grid(theta, h, w)                             # (B*G,h,w,2)
    xsrc = jnp.broadcast_to(x_pool[:, None], (B, G, h_, w_, c_))
    xsrc = xsrc.reshape(B * G, h_, w_, c_)
    pooled = grid_sample_nhwc(xsrc, grid)                       # (B*G,h,w,c)
    pooled = pooled.reshape(B, G, h, w, c).transpose(1, 0, 2, 3, 4)
    x_out = x.astype(jnp.float32) + pooled
    grid_c = grid.reshape(B, G, h, w, 2).transpose(1, 0, 2, 3, 4)
    x_out = jnp.concatenate([x_out, grid_c], axis=-1)           # (G,B,h,w,c+2)
    return basic_block_apply(p['block'], x_out)


def im2pcd_forward(P, x):
    B = x.shape[0]
    # to channels-last, single group: (1,B,H,W,3)
    h = x.transpose(0, 2, 3, 1)[None].astype(COMPUTE_DTYPE)
    # VGG19 encoder
    feats = []
    ci = 0
    for v in VGG_CFG:
        if v == 'M':
            h = maxpool2(h)
            feats.append(h)
        else:
            h = conv2d_3x3(h, P['vgg_convs'][ci], relu=True,
                           out_dtype=COMPUTE_DTYPE)
            ci += 1
    x_enc1, x_enc2, x_enc3, _, x_enc5 = feats
    # avgpool + fcn encoder (Dropout = identity, eval mode)
    feat = adaptive_avg_pool_flat(x_enc5[0], 7)
    for wp in P['fc']:
        feat = linear(feat, wp, relu=True)
    h = feat.reshape(1, B, 1, 1, 1024)
    # decoder
    h = decoder_block_apply(P['dec5'], h, k=7, stride=1)
    h = regroup(h, 6)
    h = decoder_block_apply(P['dec4'], h, k=2, stride=2)
    h = spfp_apply(P['spfp3'], h, x_enc3[0])
    h = spfp_apply(P['spfp2'], h, x_enc2[0])
    h = spfp_apply(P['spfp1'], h, x_enc1[0])
    # fcn decoder
    h = conv2d_3x3(h, P['fcn_dec'][0], relu=True, out_dtype=COMPUTE_DTYPE)
    h = conv2d_1x1(h, P['fcn_dec'][1], relu=False,
                   out_dtype=jnp.float32)               # (6,B,14,14,3)
    h = h.transpose(1, 2, 3, 0, 4).reshape(B, 14, 14, 18)
    # add normalized coordinate grid and reshape to point cloud
    lin = jnp.linspace(-1.0, 1.0, 14)
    yv, xv = jnp.meshgrid(lin, lin, indexing="ij")
    h = h.at[..., 0::3].add(xv[..., None])
    h = h.at[..., 1::3].add(yv[..., None])
    return h.reshape(B, -1, 3)


if __name__ == "__main__":
    # Quick sanity check of the Pallas grouped-matmul path against XLA.
    kx = jax.random.normal(jax.random.PRNGKey(1), (2, 2, 8, 8, 96),
                           jnp.float32)
    kw = jax.random.normal(jax.random.PRNGKey(2), (160, 96, 1, 1),
                           jnp.float32) * 0.05
    kb = jax.random.normal(jax.random.PRNGKey(3), (160,), jnp.float32)
    wp_t = prep_conv2d(kw, kb, 2)
    got = conv2d_1x1(kx, wp_t, relu=True, out_dtype=jnp.float32)
    ref = jnp.einsum("gbhwc,gnc->gbhwn", kx, kw.reshape(2, 80, 96))
    ref = jnp.maximum(ref + kb.reshape(2, 80)[:, None, None, None, :], 0.0)
    assert float(jnp.max(jnp.abs(got - ref))) < 0.15, "kernel mismatch"

    key = jax.random.PRNGKey(0)
    x = jax.random.normal(key, (2, 3, 32, 32), jnp.float32)
    params = build_params(seed=0)
    out = im2pcd_forward(params, x)
    out = jax.block_until_ready(out)
    assert out.shape == (2, 14 * 14 * 6, 3), out.shape
    print("KERNEL_OK")
</pallas_src>

<mosaic_0001>
module attributes {stable_mosaic.version = 11 : i64} {
  func.func @_gmm_kernel_single(%arg0: i32, %arg1: i32, %arg2: i32, %arg3: i32, %arg4: memref<1x128x128xbf16, #tpu.memory_space<vmem>>, %arg5: memref<1x128x128xbf16, #tpu.memory_space<vmem>>, %arg6: memref<1x1x128xf32, #tpu.memory_space<vmem>>, %arg7: memref<1x128x128xf32, #tpu.memory_space<vmem>>) attributes {dimension_semantics = [#tpu.dimension_semantics<parallel>, #tpu.dimension_semantics<parallel>, #tpu.dimension_semantics<parallel>, #tpu.dimension_semantics<arbitrary>], iteration_bounds = array<i64: 2, 1, 1, 1>, scalar_prefetch = 0 : i64, scratch_operands = 0 : i64, tpu.core_type = #tpu.core_type<tc>, window_params = [{transform_indices = @transform_0, window_bounds = array<i64: 1, 128, 128>}, {transform_indices = @transform_1, window_bounds = array<i64: 1, 128, 128>}, {transform_indices = @transform_2, window_bounds = array<i64: 1, 1, 128>}, {transform_indices = @transform_3, window_bounds = array<i64: 1, 128, 128>}]} {
    %c0 = arith.constant 0 : index
    %c0_0 = arith.constant 0 : index
    %c0_1 = arith.constant 0 : index
    %0 = vector.load %arg4[%c0, %c0_0, %c0_1] : memref<1x128x128xbf16, #tpu.memory_space<vmem>>, vector<1x128x128xbf16>
    %1 = vector.shape_cast %0 : vector<1x128x128xbf16> to vector<128x128xbf16>
    %c0_2 = arith.constant 0 : index
    %c0_3 = arith.constant 0 : index
    %c0_4 = arith.constant 0 : index
    %2 = vector.load %arg5[%c0_2, %c0_3, %c0_4] : memref<1x128x128xbf16, #tpu.memory_space<vmem>>, vector<1x128x128xbf16>
    %3 = vector.shape_cast %2 : vector<1x128x128xbf16> to vector<128x128xbf16>
    %cst = arith.constant dense<0.000000e+00> : vector<128x128xf32>
    %4 = tpu.matmul %1, %3, %cst {dimension_numbers = #tpu.dot_dimension_numbers<[1], [0], [0], [1], [0, 0, 1, 1], [], []>} : vector<128x128xbf16>, vector<128x128xbf16>, vector<128x128xf32> -> vector<128x128xf32>
    %c0_5 = arith.constant 0 : index
    %c0_6 = arith.constant 0 : index
    %c0_7 = arith.constant 0 : index
    %5 = vector.load %arg6[%c0_5, %c0_6, %c0_7] : memref<1x1x128xf32, #tpu.memory_space<vmem>>, vector<1x1x128xf32>
    %6 = vector.shape_cast %5 : vector<1x1x128xf32> to vector<1x128xf32>
    %7 = vector.broadcast %6 : vector<1x128xf32> to vector<128x128xf32>
    %8 = arith.addf %4, %7 : vector<128x128xf32>
    %cst_8 = arith.constant 0.000000e+00 : f32
    %9 = vector.broadcast %cst_8 : f32 to vector<128x128xf32>
    %10 = arith.maximumf %8, %9 : vector<128x128xf32>
    %11 = vector.shape_cast %10 : vector<128x128xf32> to vector<1x128x128xf32>
    %c0_9 = arith.constant 0 : index
    %c0_10 = arith.constant 0 : index
    %c0_11 = arith.constant 0 : index
    %12 = vector.load %arg7[%c0_9, %c0_10, %c0_11] : memref<1x128x128xf32, #tpu.memory_space<vmem>>, vector<1x128x128xf32>
    tpu.vector_store %arg7[%c0_9, %c0_10, %c0_11], %11 {strides = array<i32>} : memref<1x128x128xf32, #tpu.memory_space<vmem>>, vector<1x128x128xf32>,
    return
  }
  func.func @transform_0(%arg0: i32, %arg1: i32, %arg2: i32, %arg3: i32) -> (i32, i32, i32) {
    %c0_i32 = arith.constant 0 : i32
    return %arg0, %arg1, %arg3 : i32, i32, i32
  }
  func.func @transform_1(%arg0: i32, %arg1: i32, %arg2: i32, %arg3: i32) -> (i32, i32, i32) {
    %c0_i32 = arith.constant 0 : i32
    return %arg0, %arg3, %arg2 : i32, i32, i32
  }
  func.func @transform_2(%arg0: i32, %arg1: i32, %arg2: i32, %arg3: i32) -> (i32, i32, i32) {
    %c0_i32 = arith.constant 0 : i32
    %c0_i32_0 = arith.constant 0 : i32
    return %arg0, %c0_i32, %arg2 : i32, i32, i32
  }
  func.func @transform_3(%arg0: i32, %arg1: i32, %arg2: i32, %arg3: i32) -> (i32, i32, i32) {
    %c0_i32 = arith.constant 0 : i32
    return %arg0, %arg1, %arg2 : i32, i32, i32
  }
}

</mosaic_0001>

<llo_original>
// kernel: tpu_custom_call.1
$region0: #{tpu_custom_call.1}
  #allocation0 [shape = 'u32[]', space=smem, size = 0x4, offset = 0x4, fixed_abs, tag = 'smem constant byte address 0x4 - core index']
  #allocation1 [shape = 'u32[144,128]{1,0:T(1,128)}', space=vmem, size = 0x12000, scoped, tag = 'internal scratch']
  %s0 = inlined_call_operand.hbm [shape: bf16[2,128,128], index: 0, kind: input, shape index: {}]
  %s1 = inlined_call_operand.hbm [shape: bf16[2,128,128], index: 1, kind: input, shape index: {}]
  %s2 = inlined_call_operand.vmem [shape: f32[2,1,128], index: 2, kind: input, shape index: {}]
  %s3 = inlined_call_operand.hbm [shape: f32[2,128,128], index: 3, kind: output, shape index: {}]
  %s4 = sld [smem:[#allocation0]]
  $region53: #{tpu_custom_call.1} parent=0
    _
  %s6 = ssub.s32 1, %s4
  %s7 = scalar_select 0, %s6, %s4
  $region1: #{tpu_custom_call.1} parent=0
    #allocation2 [shape = 'u8[65536]{0}', space=vmem, size = 0x10000, scoped, tag = 'input window, operand 0']
    #allocation3 [shape = 's32[2]{0}', space=sflag, size = 0x8, scoped, tag = 'scoped memory for tpu_custom_call.1']
    #allocation4 [shape = 's32[2]{0}', space=sflag, size = 0x8, scoped, tag = 'scoped memory for tpu_custom_call.1']
    #allocation5 [shape = 'u8[65536]{0}', space=vmem, size = 0x10000, scoped, tag = 'input window, operand 1']
    #allocation6 [shape = 's32[2]{0}', space=sflag, size = 0x8, scoped, tag = 'scoped memory for tpu_custom_call.1']
    #allocation7 [shape = 'u8[131072]{0}', space=vmem, size = 0x20000, scoped, tag = 'output window, operand 0']
    %8 = vsyncpa [#allocation3], 0
    %s9 = scalar_lea.sflag [#allocation3], 1
    %10 = vsyncpa %s9, 0
    %11 = vsyncpa [#allocation6], 0
    %s12 = scalar_lea.sflag [#allocation6], 1
    %13 = vsyncpa %s12, 0
    %14 = vsyncpa [#allocation4], 0
    %s15 = scalar_lea.sflag [#allocation4], 1
    %16 = vsyncpa %s15, 0
    loop: start=0, step=1, limit=4
    $region2: #{tpu_custom_call.1} parent=1 // loop_pre_header
      _
    $region3: #{tpu_custom_call.1} parent=1 // loop_header
      %s18 = sphi 0, %s22
      %p19 = scmp.ge.s32.totalorder %s18, 4
      %s25 = sphi 0, %s51
      %s26 = sphi 0, %s47
      %s27 = sphi 0, %s43
      %s28 = sphi 0, %s39
      %s29 = sphi 0, %s25
      %s30 = sphi 0, %s26
      %s31 = sphi 0, %s27
      %s32 = sphi 0, %s28
      %s33 = sphi 0, %s29
      %s34 = sphi 0, %s30
      %s35 = sphi 0, %s31
      %s36 = sphi 0, %s32
      %s58 = sphi 0, %s60
      %s61 = sphi 0, %s58
      %s62 = sphi 0, %s61
      %s78 = sphi 0, %s62
      %s88 = sphi 0, %s90
      %s91 = sphi 0, %s88
      %s92 = sphi 0, %s91
      %s108 = sphi 0, %s92
      %s116 = sphi 0, %s118
      %s119 = sphi 0, %s116
      %s120 = sphi 0, %s119
      %s136 = sphi 0, %s120
      %s146 = sphi 0, %s148
      %s149 = sphi 0, %s146
      %s150 = sphi 0, %s149
      %s166 = sphi 0, %s150
    $region4: #{tpu_custom_call.1} parent=1 // loop_header_branch
      %21 = sbr.rel (%p19) target = $region8
    $region5: #{tpu_custom_call.1} parent=1 // loop_body
      %s23 = ssub.s32 %s18, 1
      %s24 = ssub.s32 %s18, 2
      %s37 = sadd.s32 1, %s28
      %p38 = scmp.ge.s32.totalorder %s37, 1
      %s39 = scalar_select %p38, 0, %s37
      %s40 = sadd.s32 1, %s27
      %s41 = scalar_select %p38, %s40, %s27
      %p42 = scmp.ge.s32.totalorder %s41, 1
      %s43 = scalar_select %p42, 0, %s41
      %s44 = sadd.s32 1, %s26
      %s45 = scalar_select %p42, %s44, %s26
      %p46 = scmp.ge.s32.totalorder %s45, 1
      %s47 = scalar_select %p46, 0, %s45
      %s48 = sadd.s32 1, %s25
      %s49 = scalar_select %p46, %s48, %s25
      %p50 = scmp.ge.s32.totalorder %s49, 2
      %s51 = scalar_select %p50, 0, %s49
      %s52 = ssub.s32 %s25, %s51
      %s53 = ssub.s32 %s26, %s47
      %s54 = sor.u32 %s52, %s53
      %s55 = ssub.s32 %s28, %s39
      %s56 = sor.u32 %s54, %s55
      %p57 = scmp.eq.s32.totalorder %s56, 0
      %s59 = sadd.s32 %s58, 1
      %s60 = scalar_select %p57, %s58, %s59
      %p63 = pneg %p57
      %p64 = scmp.eq.s32.totalorder %s18, 1
      %p65 = por %p63, %p64
      %p66 = scmp.ne.s32.totalorder %s58, %s61
      %p67 = scmp.eq.s32.totalorder %s18, 0
      %p68 = por %p66, %p67
      %p69 = scmp.ne.s32.totalorder %s58, %s61
      %p70 = scmp.eq.s32.totalorder %s23, 1
      %p71 = por %p69, %p70
      %p72 = scmp.ne.s32.totalorder %s61, %s62
      %p73 = scmp.eq.s32.totalorder %s23, 0
      %p74 = por %p72, %p73
      %p75 = scmp.ne.s32.totalorder %s61, %s62
      %p76 = scmp.eq.s32.totalorder %s24, 1
      %p77 = por %p75, %p76
      %p79 = scmp.ne.s32.totalorder %s62, %s78
      %p80 = scmp.eq.s32.totalorder %s24, 0
      %p81 = por %p79, %p80
      %s82 = ssub.s32 %s25, %s51
      %s83 = ssub.s32 %s28, %s39
      %s84 = sor.u32 %s82, %s83
      %s85 = ssub.s32 %s27, %s43
      %s86 = sor.u32 %s84, %s85
      %p87 = scmp.eq.s32.totalorder %s86, 0
      %s89 = sadd.s32 %s88, 1
      %s90 = scalar_select %p87, %s88, %s89
      %p93 = pneg %p87
      %p94 = scmp.eq.s32.totalorder %s18, 1
      %p95 = por %p93, %p94
      %p96 = scmp.ne.s32.totalorder %s88, %s91
      %p97 = scmp.eq.s32.totalorder %s18, 0
      %p98 = por %p96, %p97
      %p99 = scmp.ne.s32.totalorder %s88, %s91
      %p100 = scmp.eq.s32.totalorder %s23, 1
      %p101 = por %p99, %p100
      %p102 = scmp.ne.s32.totalorder %s91, %s92
      %p103 = scmp.eq.s32.totalorder %s23, 0
      %p104 = por %p102, %p103
      %p105 = scmp.ne.s32.totalorder %s91, %s92
      %p106 = scmp.eq.s32.totalorder %s24, 1
      %p107 = por %p105, %p106
      %p109 = scmp.ne.s32.totalorder %s92, %s108
      %p110 = scmp.eq.s32.totalorder %s24, 0
      %p111 = por %p109, %p110
      %s112 = ssub.s32 %s25, %s51
      %s113 = ssub.s32 %s27, %s43
      %s114 = sor.u32 %s112, %s113
      %p115 = scmp.eq.s32.totalorder %s114, 0
      %s117 = sadd.s32 %s116, 1
      %s118 = scalar_select %p115, %s116, %s117
      %p121 = pneg %p115
      %p122 = scmp.eq.s32.totalorder %s18, 1
      %p123 = por %p121, %p122
      %p124 = scmp.ne.s32.totalorder %s116, %s119
      %p125 = scmp.eq.s32.totalorder %s18, 0
      %p126 = por %p124, %p125
      %p127 = scmp.ne.s32.totalorder %s116, %s119
      %p128 = scmp.eq.s32.totalorder %s23, 1
      %p129 = por %p127, %p128
      %p130 = scmp.ne.s32.totalorder %s119, %s120
      %p131 = scmp.eq.s32.totalorder %s23, 0
      %p132 = por %p130, %p131
      %p133 = scmp.ne.s32.totalorder %s119, %s120
      %p134 = scmp.eq.s32.totalorder %s24, 1
      %p135 = por %p133, %p134
      %p137 = scmp.ne.s32.totalorder %s120, %s136
      %p138 = scmp.eq.s32.totalorder %s24, 0
      %p139 = por %p137, %p138
      %s140 = ssub.s32 %s25, %s51
      %s141 = ssub.s32 %s26, %s47
      %s142 = sor.u32 %s140, %s141
      %s143 = ssub.s32 %s27, %s43
      %s144 = sor.u32 %s142, %s143
      %p145 = scmp.eq.s32.totalorder %s144, 0
      %s147 = sadd.s32 %s146, 1
      %s148 = scalar_select %p145, %s146, %s147
      %p151 = pneg %p145
      %p152 = scmp.eq.s32.totalorder %s18, 1
      %p153 = por %p151, %p152
      %p154 = scmp.ne.s32.totalorder %s146, %s149
      %p155 = scmp.eq.s32.totalorder %s18, 0
      %p156 = por %p154, %p155
      %p157 = scmp.ne.s32.totalorder %s146, %s149
      %p158 = scmp.eq.s32.totalorder %s23, 1
      %p159 = por %p157, %p158
      %p160 = scmp.ne.s32.totalorder %s149, %s150
      %p161 = scmp.eq.s32.totalorder %s23, 0
      %p162 = por %p160, %p161
      %p163 = scmp.ne.s32.totalorder %s149, %s150
      %p164 = scmp.eq.s32.totalorder %s24, 1
      %p165 = por %p163, %p164
      %p167 = scmp.ne.s32.totalorder %s150, %s166
      %p168 = scmp.eq.s32.totalorder %s24, 0
      %p169 = por %p167, %p168
      %p170 = scmp.le.s32.totalorder 1, %s18
      %p171 = scmp.lt.s32.totalorder %s18, 3
      %p172 = pnand %p170, %p171
      %p173 = pneg %p172
      // Predicated region
      $region9: #{tpu_custom_call.1} parent=5 // pred_check
        _
      $region10: #{tpu_custom_call.1} parent=5 // pred_check_branch
        %175 = sbr.rel (%p172) target = $region12
      $region11: #{tpu_custom_call.1} parent=5 // pred_region
        %s176 = ssub.s32 %s18, 1
      $region12: #{tpu_custom_call.1} parent=5 // pred_fallthru
        _
      %p177 = scmp.lt.s32.totalorder %s18, 2
      // Predicated region
      $region13: #{tpu_custom_call.1} parent=5 // pred_check
        %p178 = pneg %p177
      $region14: #{tpu_custom_call.1} parent=5 // pred_check_branch
        %180 = sbr.rel (%p178) target = $region16
      $region15: #{tpu_custom_call.1} parent=5 // pred_region
        // Predicated region
        $region17: #{tpu_custom_call.1} parent=15 // pred_check
          %p181 = pneg %p68
        $region18: #{tpu_custom_call.1} parent=15 // pred_check_branch
          %183 = sbr.rel (%p181) target = $region20
        $region19: #{tpu_custom_call.1} parent=15 // pred_region
          %s184 = sand.u32 %s58, 1
          %s185 = scalar_lea.sflag [#allocation3], %s184
          %s186 = sand.u32 %s58, 1
          %s187 = smul.addr %s186, 64
          %s188 = scalar_lea.vmem [#allocation2], %s187
          %s189 = smul.u32 16, %s26
          %s191 = ssub.s32 1024, 1024
          %192 = vsyncadd %s185, %s191
          %s193 = sadd.s32 %s28, %s189
          %s194 = smul.addr %s25, 16
          %s195 = sadd.s32 %s193, %s194
          %s196 = smul.addr %s195, 64
          %s197 = scalar_lea.hbm %s0, %s196
          %s198 = sshll.u32 %s188, 4
          %s199 = int_to_ptr.vmem [resolvable:$true] %s198
          %204 = dma.hbm_to_vmem [thread:$0]  %s197, 1024, %s199, %s185, 64, 64, 4
        $region20: #{tpu_custom_call.1} parent=15 // pred_fallthru
          _
        // Predicated region
        $region21: #{tpu_custom_call.1} parent=15 // pred_check
          %p205 = pneg %p98
        $region22: #{tpu_custom_call.1} parent=15 // pred_check_branch
          %207 = sbr.rel (%p205) target = $region24
        $region23: #{tpu_custom_call.1} parent=15 // pred_region
          %s208 = sand.u32 %s88, 1
          %s209 = scalar_lea.sflag [#allocation6], %s208
          %s210 = sand.u32 %s88, 1
          %s211 = smul.addr %s210, 64
          %s212 = scalar_lea.vmem [#allocation5], %s211
          %s213 = smul.u32 16, %s28
          %s215 = ssub.s32 1024, 1024
          %216 = vsyncadd %s209, %s215
          %s217 = sadd.s32 %s27, %s213
          %s218 = smul.addr %s25, 16
          %s219 = sadd.s32 %s217, %s218
          %s220 = smul.addr %s219, 64
          %s221 = scalar_lea.hbm %s1, %s220
          %s222 = sshll.u32 %s212, 4
          %s223 = int_to_ptr.vmem [resolvable:$true] %s222
          %228 = dma.hbm_to_vmem [thread:$0]  %s221, 1024, %s223, %s209, 64, 64, 4
        $region24: #{tpu_custom_call.1} parent=15 // pred_fallthru
          _
        // Predicated region
        $region25: #{tpu_custom_call.1} parent=15 // pred_check
          %p229 = pneg %p126
        $region26: #{tpu_custom_call.1} parent=15 // pred_check_branch
          %231 = sbr.rel (%p229) target = $region28
        $region27: #{tpu_custom_call.1} parent=15 // pred_region
          %p232 = scmp.lt.s32.totalorder %s25, 1
          %s233 = scalar_select %p232, %s25, 1
          %p234 = scmp.lt.s32.totalorder %s27, 0
          %s235 = scalar_select %p234, %s27, 0
          %s236 = sadd.s32 %s235, %s233
          %s237 = scalar_lea.vmem %s2, %s236
        $region28: #{tpu_custom_call.1} parent=15 // pred_fallthru
          _
      $region16: #{tpu_custom_call.1} parent=5 // pred_fallthru
        _
      %p238 = scmp.le.s32.totalorder 1, %s18
      %p239 = scmp.lt.s32.totalorder %s18, 3
      %p240 = pnand %p238, %p239
      %p241 = pneg %p240
      // Predicated region
      $region29: #{tpu_custom_call.1} parent=5 // pred_check
        _
      $region30: #{tpu_custom_call.1} parent=5 // pred_check_branch
        %243 = sbr.rel (%p240) target = $region32
      $region31: #{tpu_custom_call.1} parent=5 // pred_region
        %s244 = ssub.s32 %s18, 1
        %s245 = sand.u32 %s61, 1
        %s246 = scalar_lea.sflag [#allocation3], %s245
        %s247 = sand.u32 %s61, 1
        %s248 = smul.addr %s247, 64
        %s249 = scalar_lea.vmem [#allocation2], %s248
        // Predicated region
        $region33: #{tpu_custom_call.1} parent=31 // pred_check
          %p250 = pneg %p74
        $region34: #{tpu_custom_call.1} parent=31 // pred_check_branch
          %252 = sbr.rel (%p250) target = $region36
        $region35: #{tpu_custom_call.1} parent=31 // pred_region
          %253 = dma.done %s246, 1024
        $region36: #{tpu_custom_call.1} parent=31 // pred_fallthru
          _
        %s254 = sand.u32 %s91, 1
        %s255 = scalar_lea.sflag [#allocation6], %s254
        %s256 = sand.u32 %s91, 1
        %s257 = smul.addr %s256, 64
        %s258 = scalar_lea.vmem [#allocation5], %s257
        // Predicated region
        $region37: #{tpu_custom_call.1} parent=31 // pred_check
          %p259 = pneg %p104
        $region38: #{tpu_custom_call.1} parent=31 // pred_check_branch
          %261 = sbr.rel (%p259) target = $region40
        $region39: #{tpu_custom_call.1} parent=31 // pred_region
          %262 = dma.done %s255, 1024
        $region40: #{tpu_custom_call.1} parent=31 // pred_fallthru
          _
        %s263 = sand.u32 %s61, 1
        %s264 = scalar_lea.sflag [#allocation3], %s263
        %s265 = sand.u32 %s61, 1
        %s266 = smul.addr %s265, 64
        %s267 = scalar_lea.vmem [#allocation2], %s266
        %p268 = pneg %p74
        %p269 = pneg %p71
        %s270 = sand.u32 %s91, 1
        %s271 = scalar_lea.sflag [#allocation6], %s270
        %s272 = sand.u32 %s91, 1
        %s273 = smul.addr %s272, 64
        %s274 = scalar_lea.vmem [#allocation5], %s273
        %p275 = pneg %p104
        %p276 = pneg %p101
        %p277 = scmp.lt.s32.totalorder %s29, 1
        %s278 = scalar_select %p277, %s29, 1
        %p279 = scmp.lt.s32.totalorder %s31, 0
        %s280 = scalar_select %p279, %s31, 0
        %s281 = sadd.s32 %s280, %s278
        %s282 = scalar_lea.vmem %s2, %s281
        %p283 = pneg %p132
        %p284 = pneg %p129
        %p285 = pneg %p162
        %p286 = pneg %p159
        %s287 = sand.u32 %s149, 1
        %s288 = scalar_lea.sflag [#allocation4], %s287
        %s289 = sand.u32 %s149, 1
        %s290 = smul.addr %s289, 128
        %s291 = scalar_lea.vmem [#allocation7], %s290
        %s292 = smul.u32 16, %s30
        %s293 = smul.u32 16, %s32
        %p294 = scmp.lt.s32.totalorder %s29, 1
        %s295 = scalar_select %p294, %s29, 1
        %p296 = scmp.lt.s32.totalorder %s31, 0
        %s297 = scalar_select %p296, %s31, 0
        %s298 = sadd.s32 %s297, %s295
        %s299 = scalar_lea.vmem %s2, %s298
        %s300 = smul.u32 16, %s30
        %v302 = vld [vmem:[%s249] sm:$0xf]
        %v303 = vld [vmem:[%s249 + $0x4] sm:$0xf]
        %v304 = vld [vmem:[%s249 + $0x8] sm:$0xf]
        %v305 = vld [vmem:[%s249 + $0xc] sm:$0xf]
        %v306 = vld [vmem:[%s249 + $0x10] sm:$0xf]
        %v307 = vld [vmem:[%s249 + $0x14] sm:$0xf]
        %v308 = vld [vmem:[%s249 + $0x18] sm:$0xf]
        %v309 = vld [vmem:[%s249 + $0x1c] sm:$0xf]
        %v310 = vld [vmem:[%s249 + $0x20] sm:$0xf]
        %v311 = vld [vmem:[%s249 + $0x24] sm:$0xf]
        %v312 = vld [vmem:[%s249 + $0x28] sm:$0xf]
        %v313 = vld [vmem:[%s249 + $0x2c] sm:$0xf]
        %v314 = vld [vmem:[%s249 + $0x30] sm:$0xf]
        %v315 = vld [vmem:[%s249 + $0x34] sm:$0xf]
        %v316 = vld [vmem:[%s249 + $0x38] sm:$0xf]
        %v317 = vld [vmem:[%s249 + $0x3c] sm:$0xf]
        %v318 = vld [vmem:[%s258] sm:$0xf]
        %v319 = vld [vmem:[%s258 + $0x4] sm:$0xf]
        %v320 = vld [vmem:[%s258 + $0x8] sm:$0xf]
        %v321 = vld [vmem:[%s258 + $0xc] sm:$0xf]
        %v322 = vld [vmem:[%s258 + $0x10] sm:$0xf]
        %v323 = vld [vmem:[%s258 + $0x14] sm:$0xf]
        %v324 = vld [vmem:[%s258 + $0x18] sm:$0xf]
        %v325 = vld [vmem:[%s258 + $0x1c] sm:$0xf]
        %v326 = vld [vmem:[%s258 + $0x20] sm:$0xf]
        %v327 = vld [vmem:[%s258 + $0x24] sm:$0xf]
        %v328 = vld [vmem:[%s258 + $0x28] sm:$0xf]
        %v329 = vld [vmem:[%s258 + $0x2c] sm:$0xf]
        %v330 = vld [vmem:[%s258 + $0x30] sm:$0xf]
        %v331 = vld [vmem:[%s258 + $0x34] sm:$0xf]
        %v332 = vld [vmem:[%s258 + $0x38] sm:$0xf]
        %v333 = vld [vmem:[%s258 + $0x3c] sm:$0xf]
        %v334 = vld [vmem:[%s299] sm:$0x1]
        %v336 = vlaneseq
        %v337 = vshrl.u32 %v336, 7
        %v338 = vsub.s32 0, %v337
        %v339 = vrot.slane %v334, %v338
        %v357 = vunpack.c.l.b16 %v302
        %v358 = vunpack.c.l.b16 %v303
        %v359 = vunpack.c.l.b16 %v304
        %v360 = vunpack.c.l.b16 %v305
        %v361 = vunpack.c.l.b16 %v306
        %v362 = vunpack.c.l.b16 %v307
        %v363 = vunpack.c.l.b16 %v308
        %v364 = vunpack.c.l.b16 %v309
        %v365 = vunpack.c.l.b16 %v310
        %v366 = vunpack.c.l.b16 %v311
        %v367 = vunpack.c.l.b16 %v312
        %v368 = vunpack.c.l.b16 %v313
        %v369 = vunpack.c.l.b16 %v314
        %v370 = vunpack.c.l.b16 %v315
        %v371 = vunpack.c.l.b16 %v316
        %v372 = vunpack.c.l.b16 %v317
        %v373 = vpack.c.b16 %v358, %v357
        %v374 = vpack.c.b16 %v360, %v359
        %v375 = vpack.c.b16 %v362, %v361
        %v376 = vpack.c.b16 %v364, %v363
        %v377 = vpack.c.b16 %v366, %v365
        %v378 = vpack.c.b16 %v368, %v367
        %v379 = vpack.c.b16 %v370, %v369
        %v380 = vpack.c.b16 %v372, %v371
        %v405 = vunpack.c.l.b16 %v318
        %v406 = vunpack.c.l.b16 %v319
        %v407 = vunpack.c.l.b16 %v320
        %v408 = vunpack.c.l.b16 %v321
        %v409 = vunpack.c.l.b16 %v322
        %v410 = vunpack.c.l.b16 %v323
        %v411 = vunpack.c.l.b16 %v324
        %v412 = vunpack.c.l.b16 %v325
        %v413 = vunpack.c.l.b16 %v326
        %v414 = vunpack.c.l.b16 %v327
        %v415 = vunpack.c.l.b16 %v328
        %v416 = vunpack.c.l.b16 %v329
        %v417 = vunpack.c.l.b16 %v330
        %v418 = vunpack.c.l.b16 %v331
        %v419 = vunpack.c.l.b16 %v332
        %v420 = vunpack.c.l.b16 %v333
        %v421 = vpack.c.b16 %v406, %v405
        %v422 = vpack.c.b16 %v408, %v407
        %v423 = vpack.c.b16 %v410, %v409
        %v424 = vpack.c.b16 %v412, %v411
        %v425 = vpack.c.b16 %v414, %v413
        %v426 = vpack.c.b16 %v416, %v415
        %v427 = vpack.c.b16 %v418, %v417
        %v428 = vpack.c.b16 %v420, %v419
        %437 = vmatprep.subr.bf16.mxu0 0
        %438 = vmatpush1.bf16.msra.mxu0 %v428
        %439 = vmatprep.subr.bf16.mxu0 0
        %440 = vmatpush1.bf16.msra.mxu0 %v427
        %441 = vmatprep.subr.bf16.mxu0 0
        %442 = vmatpush1.bf16.msra.mxu0 %v426
        %443 = vmatprep.subr.bf16.mxu0 0
        %444 = vmatpush1.bf16.msra.mxu0 %v425
        %445 = vmatprep.subr.bf16.mxu0 0
        %446 = vmatpush1.bf16.msra.mxu0 %v424
        %447 = vmatprep.subr.bf16.mxu0 0
        %448 = vmatpush1.bf16.msra.mxu0 %v423
        %449 = vmatprep.subr.bf16.mxu0 0
        %450 = vmatpush1.bf16.msra.mxu0 %v422
        %451 = vmatprep.subr.bf16.mxu0 0
        %452 = vmatpush1.bf16.msra.mxu0 %v421
        %453 = vmatprep.subr.bf16.mxu0 0
        %454 = vmatpush2.bf16.msra.mxu0 0
        %455 = vmatprep.subr.bf16.mxu0 0
        %456 = vmatpush2.bf16.msra.mxu0 0
        %457 = vmatprep.subr.bf16.mxu0 0
        %458 = vmatpush2.bf16.msra.mxu0 0
        %459 = vmatprep.subr.bf16.mxu0 0
        %460 = vmatpush2.bf16.msra.mxu0 0
        %461 = vmatprep.subr.bf16.mxu0 0
        %462 = vmatpush2.bf16.msra.mxu0 0
        %463 = vmatprep.subr.bf16.mxu0 0
        %464 = vmatpush2.bf16.msra.mxu0 0
        %465 = vmatprep.subr.bf16.mxu0 0
        %466 = vmatpush2.bf16.msra.mxu0 0
        %467 = vmatprep.subr.bf16.mxu0 0
        %468 = vmatpush2.bf16.msra.mxu0 0
        %469 = vmatprep.mubr.bf16.mxu0 0
        %470 = vmatmul.mubr.bf16.gmra.mxu0 %v373
        %v471 = vpop.f32.mrf.mxu0
        %v472 = vadd.f32 %v339, %v471
        %v473 = vpop.f32.mrf.mxu0
        %v474 = vpop.f32.mrf.mxu0
        %v475 = vadd.f32 %v339, %v474
        %v476 = vpop.f32.mrf.mxu0
        %477 = vmatprep.mubr.bf16.mxu0 0
        %478 = vmatmul.mubr.bf16.gmra.mxu0 %v374
        %v479 = vpop.f32.mrf.mxu0
        %v480 = vadd.f32 %v339, %v479
        %v481 = vpop.f32.mrf.mxu0
        %v482 = vpop.f32.mrf.mxu0
        %v483 = vadd.f32 %v339, %v482
        %v484 = vpop.f32.mrf.mxu0
        %485 = vmatprep.mubr.bf16.mxu0 0
        %486 = vmatmul.mubr.bf16.gmra.mxu0 %v375
        %v487 = vpop.f32.mrf.mxu0
        %v488 = vadd.f32 %v339, %v487
        %v489 = vpop.f32.mrf.mxu0
        %v490 = vpop.f32.mrf.mxu0
        %v491 = vadd.f32 %v339, %v490
        %v492 = vpop.f32.mrf.mxu0
        %493 = vmatprep.mubr.bf16.mxu0 0
        %494 = vmatmul.mubr.bf16.gmra.mxu0 %v376
        %v495 = vpop.f32.mrf.mxu0
        %v496 = vadd.f32 %v339, %v495
        %v497 = vpop.f32.mrf.mxu0
        %v498 = vpop.f32.mrf.mxu0
        %v499 = vadd.f32 %v339, %v498
        %v500 = vpop.f32.mrf.mxu0
        %501 = vmatprep.mubr.bf16.mxu0 0
        %502 = vmatmul.mubr.bf16.gmra.mxu0 %v377
        %v503 = vpop.f32.mrf.mxu0
        %v504 = vadd.f32 %v339, %v503
        %v505 = vpop.f32.mrf.mxu0
        %v506 = vpop.f32.mrf.mxu0
        %v507 = vadd.f32 %v339, %v506
        %v508 = vpop.f32.mrf.mxu0
        %509 = vmatprep.mubr.bf16.mxu0 0
        %510 = vmatmul.mubr.bf16.gmra.mxu0 %v378
        %v511 = vpop.f32.mrf.mxu0
        %v512 = vadd.f32 %v339, %v511
        %v513 = vpop.f32.mrf.mxu0
        %v514 = vpop.f32.mrf.mxu0
        %v515 = vadd.f32 %v339, %v514
        %v516 = vpop.f32.mrf.mxu0
        %517 = vmatprep.mubr.bf16.mxu0 0
        %518 = vmatmul.mubr.bf16.gmra.mxu0 %v379
        %v519 = vpop.f32.mrf.mxu0
        %v520 = vadd.f32 %v339, %v519
        %v521 = vpop.f32.mrf.mxu0
        %v522 = vpop.f32.mrf.mxu0
        %v523 = vadd.f32 %v339, %v522
        %v524 = vpop.f32.mrf.mxu0
        %525 = vmatprep.mubr.bf16.mxu0 0
        %526 = vmatmul.mubr.bf16.gmra.mxu0 %v380
        %v527 = vpop.f32.mrf.mxu0
        %v528 = vadd.f32 %v339, %v527
        %v529 = vpop.f32.mrf.mxu0
        %v530 = vpop.f32.mrf.mxu0
        %v531 = vadd.f32 %v339, %v530
        %v532 = vpop.f32.mrf.mxu0
        %533 = vdwg.mxu0
        %v534 = vmax.f32 %v472, 0.0
        %v535 = vmax.f32 %v475, 0.0
        %v536 = vmax.f32 %v480, 0.0
        %v537 = vmax.f32 %v483, 0.0
        %v538 = vmax.f32 %v488, 0.0
        %v539 = vmax.f32 %v491, 0.0
        %v540 = vmax.f32 %v496, 0.0
        %v541 = vmax.f32 %v499, 0.0
        %v542 = vmax.f32 %v504, 0.0
        %v543 = vmax.f32 %v507, 0.0
        %v544 = vmax.f32 %v512, 0.0
        %v545 = vmax.f32 %v515, 0.0
        %v546 = vmax.f32 %v520, 0.0
        %v547 = vmax.f32 %v523, 0.0
        %v548 = vmax.f32 %v528, 0.0
        %v549 = vmax.f32 %v531, 0.0
        %550 = vst [vmem:[%s291] sm:$0xff] %v534
        %551 = vst [vmem:[%s291 + $0x8] sm:$0xff] %v535
        %552 = vst [vmem:[%s291 + $0x10] sm:$0xff] %v536
        %553 = vst [vmem:[%s291 + $0x18] sm:$0xff] %v537
        %554 = vst [vmem:[%s291 + $0x20] sm:$0xff] %v538
        %555 = vst [vmem:[%s291 + $0x28] sm:$0xff] %v539
        %556 = vst [vmem:[%s291 + $0x30] sm:$0xff] %v540
        %557 = vst [vmem:[%s291 + $0x38] sm:$0xff] %v541
        %558 = vst [vmem:[%s291 + $0x40] sm:$0xff] %v542
        %559 = vst [vmem:[%s291 + $0x48] sm:$0xff] %v543
        %560 = vst [vmem:[%s291 + $0x50] sm:$0xff] %v544
        %561 = vst [vmem:[%s291 + $0x58] sm:$0xff] %v545
        %562 = vst [vmem:[%s291 + $0x60] sm:$0xff] %v546
        %563 = vst [vmem:[%s291 + $0x68] sm:$0xff] %v547
        %564 = vst [vmem:[%s291 + $0x70] sm:$0xff] %v548
        %565 = vst [vmem:[%s291 + $0x78] sm:$0xff] %v549
        %s566 = sand.u32 %s149, 1
        %s567 = scalar_lea.sflag [#allocation4], %s566
        %s568 = sand.u32 %s149, 1
        %s569 = smul.addr %s568, 128
        %s570 = scalar_lea.vmem [#allocation7], %s569
        // Predicated region
        $region41: #{tpu_custom_call.1} parent=31 // pred_check
          %p571 = pneg %p159
        $region42: #{tpu_custom_call.1} parent=31 // pred_check_branch
          %573 = sbr.rel (%p571) target = $region44
        $region43: #{tpu_custom_call.1} parent=31 // pred_region
          %s574 = smul.u32 16, %s30
          %s576 = ssub.s32 2048, 2048
          %577 = vsyncadd %s567, %s576
          %s578 = sadd.s32 %s31, %s574
          %s579 = smul.addr %s29, 16
          %s580 = sadd.s32 %s578, %s579
          %s581 = smul.addr %s580, 128
          %s582 = scalar_lea.hbm %s3, %s581
          %s583 = sshll.u32 %s570, 4
          %s584 = int_to_ptr.vmem [resolvable:$true] %s583
          %589 = dma.vmem_to_hbm [thread:$0]  %s584, 2048, %s582, %s567, 128, 128, 8
        $region44: #{tpu_custom_call.1} parent=31 // pred_fallthru
          _
      $region32: #{tpu_custom_call.1} parent=5 // pred_fallthru
        _
      %p590 = scmp.le.s32.totalorder 2, %s18
      // Predicated region
      $region45: #{tpu_custom_call.1} parent=5 // pred_check
        %p591 = pneg %p590
      $region46: #{tpu_custom_call.1} parent=5 // pred_check_branch
        %593 = sbr.rel (%p591) target = $region48
      $region47: #{tpu_custom_call.1} parent=5 // pred_region
        %s594 = ssub.s32 %s18, 2
        // Predicated region
        $region49: #{tpu_custom_call.1} parent=47 // pred_check
          %p595 = pneg %p165
        $region50: #{tpu_custom_call.1} parent=47 // pred_check_branch
          %597 = sbr.rel (%p595) target = $region52
        $region51: #{tpu_custom_call.1} parent=47 // pred_region
          %s598 = sand.u32 %s150, 1
          %s599 = scalar_lea.sflag [#allocation4], %s598
          %s600 = sand.u32 %s150, 1
          %s601 = smul.addr %s600, 128
          %s602 = scalar_lea.vmem [#allocation7], %s601
          %603 = dma.done %s599, 2048
        $region52: #{tpu_custom_call.1} parent=47 // pred_fallthru
          _
      $region48: #{tpu_custom_call.1} parent=5 // pred_fallthru
        _
    $region6: #{tpu_custom_call.1} parent=1 // loop_footer
      %s22 = sadd.s32 1, %s18
    $region7: #{tpu_custom_call.1} parent=1 // loop_footer_branch
      %17 = sbr.rel target = $region3
    $region8: #{tpu_custom_call.1} parent=1 // loop_exit
      _
    %604 = vsyncpa [#allocation3], 1
    %s605 = scalar_lea.sflag [#allocation3], 1
    %606 = vsyncpa %s605, 1
    %607 = vsyncpa [#allocation6], 1
    %s608 = scalar_lea.sflag [#allocation6], 1
    %609 = vsyncpa %s608, 1
    %610 = vsyncpa [#allocation4], 1
    %s611 = scalar_lea.sflag [#allocation4], 1
    %612 = vsyncpa %s611, 1

</llo_original>
